<compile_context>
chip_gen: v5e
topology: v5e:2x2
jax: 0.10.0
libtpu: 0.0.40
codegen_flags: <defaults>
</compile_context>

<pallas_src>
import functools

import jax
import jax.numpy as jnp
from jax import lax
from jax.experimental import pallas as pl
from jax.experimental.pallas import tpu as pltpu

_LANES = 128
_SUBLANES = 8
_TILE_BUDGET_BYTES = 2 * 1024 * 1024   # per x/y tile (f32 working size)
_VMEM_CAP_BYTES = 48 * 1024 * 1024     # below v7x's 64 MiB physical VMEM


# ---------------------------------------------------------------------------
# Tiling helpers
# ---------------------------------------------------------------------------
def _ceil_to(v, m):
    return -(-v // m) * m


def _choose_group(L, C):
    """Pick g | L so the grouped row (L//g, g*C) packs (8,128) vregs densely."""
    best_g, best_score = 1, -1.0
    for g in range(1, L + 1):
        if L % g:
            continue
        n, m = g * C, L // g
        lane_occ = n / _ceil_to(n, _LANES)
        sub_occ = m / _ceil_to(m, _SUBLANES)
        score = lane_occ * sub_occ
        if n % _LANES == 0:      # prefer exact multiples of 128 lanes
            score += 0.25
        if score > best_score:
            best_g, best_score = g, score
    return best_g


def _choose_batch_block(B, M, N):
    """Fuse batch rows within the VMEM budget, keeping >=2 grid steps."""
    row_bytes = _ceil_to(M, _SUBLANES) * _ceil_to(N, _LANES) * 4
    cap = max(1, _TILE_BUDGET_BYTES // row_bytes)
    if B > 1:
        cap = min(cap, max(1, B // 2))   # >=2 grid steps -> both v7x cores work
    bb = 1
    for d in range(1, B + 1):
        if B % d == 0 and d <= cap:
            bb = d
    return bb


def _vmem_limit_bytes(bb, M, N):
    tile_f32 = bb * _ceil_to(M, _SUBLANES) * _ceil_to(N, _LANES) * 4
    # double-buffered in/out tiles + in-kernel fp32 temporaries, with headroom.
    return int(min(_VMEM_CAP_BYTES, max(32 * 1024 * 1024, 10 * tile_f32)))


# ---------------------------------------------------------------------------
# Kernels (grouped layout: tiles are (bb, M, N) with N = g*C, channel = j % C)
# ---------------------------------------------------------------------------
def _revin_norm_kernel(x_ref, w_ref, b_ref, y_ref, mean_ref, std_ref, *,
                       g, C, L, eps):
    # x_ref/y_ref: (bb, M, N); w_ref/b_ref: (1, N) per-lane affine params
    # mean_ref/std_ref: (bb, 1, C) per-channel stats (keepdim layout).
    x = x_ref[...].astype(jnp.float32)            # single load of the tile
    col_sum = jnp.sum(x, axis=1)                  # (bb, N) per-lane partial sums
    col_sq = jnp.sum(x * x, axis=1)               # (bb, N)

    # Fold the g lane groups that share a channel: after the rolls every lane
    # position holds the full per-channel sum (cheap XLU work on a tiny array).
    def _fold(v):
        if (g & (g - 1)) == 0:                    # power of two -> log2(g) steps
            shift = C
            while shift < g * C:
                v = v + pltpu.roll(v, shift, 1)
                shift *= 2
            return v
        out = v
        for q in range(1, g):
            out = out + pltpu.roll(v, q * C, 1)
        return out

    sum_n = _fold(col_sum)
    sq_n = _fold(col_sq)

    inv_l = 1.0 / float(L)
    mean_n = sum_n * inv_l                                       # (bb, N)
    var_n = jnp.maximum(sq_n * inv_l - mean_n * mean_n, 0.0)
    std_n = jnp.sqrt(var_n + eps)
    inv_std_n = lax.rsqrt(var_n + eps)                           # EUP slot

    scale_n = w_ref[...] * inv_std_n                             # (bb, N)
    # Centered form avoids the x*scale + shift cancellation flagged in review.
    y = (x - mean_n[:, None, :]) * scale_n[:, None, :] + b_ref[...][:, None, :]
    y_ref[...] = y.astype(y_ref.dtype)

    # Lane positions 0..C-1 carry channels 0..C-1 after the fold.
    mean_ref[...] = mean_n[:, :C][:, None, :].astype(mean_ref.dtype)
    std_ref[...] = std_n[:, :C][:, None, :].astype(std_ref.dtype)


def _revin_denorm_kernel(x_ref, bias_ref, scale_ref, mean_ref, y_ref):
    # x_ref/y_ref: (bb, M, N); bias_ref: (1, 1, N); scale/mean: (bb, 1, N)
    x = x_ref[...].astype(jnp.float32)
    y = (x - bias_ref[...]) * scale_ref[...] + mean_ref[...]
    y_ref[...] = y.astype(y_ref.dtype)


# ---------------------------------------------------------------------------
# Wrappers
# ---------------------------------------------------------------------------
def revin_norm(x, weight, bias, *, eps=1e-5, affine=True):
    """x: (B, L, C), weight/bias: (C,).  Returns (y, mean, stdev);
    y: (B, L, C), mean/stdev: (B, 1, C) (keepdim, as in the PyTorch module)."""
    B, L, C = x.shape
    g = _choose_group(L, C)
    M, N = L // g, g * C
    bb = _choose_batch_block(B, M, N)
    grid = (B // bb,)

    x3 = x.reshape(B, M, N)     # free: contiguous regrouping of the (L, C) tail
    if affine:
        w_lane = jnp.tile(weight.astype(jnp.float32), g).reshape(1, N)
        b_lane = jnp.tile(bias.astype(jnp.float32), g).reshape(1, N)
    else:
        w_lane = jnp.ones((1, N), jnp.float32)
        b_lane = jnp.zeros((1, N), jnp.float32)

    kernel = functools.partial(_revin_norm_kernel, g=g, C=C, L=L, eps=float(eps))

    y3, mean, stdev = pl.pallas_call(
        kernel,
        out_shape=(
            jax.ShapeDtypeStruct((B, M, N), x.dtype),
            jax.ShapeDtypeStruct((B, 1, C), jnp.float32),
            jax.ShapeDtypeStruct((B, 1, C), jnp.float32),
        ),
        grid_spec=pltpu.PrefetchScalarGridSpec(
            num_scalar_prefetch=0,
            grid=grid,
            in_specs=[
                pl.BlockSpec((bb, M, N), lambda i: (i, 0, 0)),
                pl.BlockSpec((1, N), lambda i: (0, 0)),
                pl.BlockSpec((1, N), lambda i: (0, 0)),
            ],
            out_specs=[
                pl.BlockSpec((bb, M, N), lambda i: (i, 0, 0)),
                pl.BlockSpec((bb, 1, C), lambda i: (i, 0, 0)),
                pl.BlockSpec((bb, 1, C), lambda i: (i, 0, 0)),
            ],
        ),
        compiler_params=pltpu.CompilerParams(
            dimension_semantics=("parallel",),
            vmem_limit_bytes=_vmem_limit_bytes(bb, M, N),
        ),
    )(x3, w_lane, b_lane)

    return y3.reshape(B, L, C), mean, stdev


def revin_denorm(x, mean, stdev, weight, bias, *, eps=1e-5, affine=True):
    """x: (B, L, C), mean/stdev: (B, 1, C), weight/bias: (C,)."""
    B, L, C = x.shape
    g = _choose_group(L, C)
    M, N = L // g, g * C
    bb = _choose_batch_block(B, M, N)
    grid = (B // bb,)

    x3 = x.reshape(B, M, N)
    mean32 = mean.astype(jnp.float32).reshape(B, 1, C)
    std32 = stdev.astype(jnp.float32).reshape(B, 1, C)
    if affine:
        w32 = weight.astype(jnp.float32).reshape(1, 1, C)
        b32 = bias.astype(jnp.float32).reshape(1, 1, C)
        scale = std32 / (w32 + float(eps) * float(eps))          # (B, 1, C)
        bias_l = jnp.tile(b32, (1, 1, g))                        # (1, 1, N)
    else:
        scale = std32
        bias_l = jnp.zeros((1, 1, N), jnp.float32)
    scale_l = jnp.tile(scale, (1, 1, g))                         # (B, 1, N)
    mean_l = jnp.tile(mean32, (1, 1, g))                         # (B, 1, N)

    y3 = pl.pallas_call(
        _revin_denorm_kernel,
        out_shape=jax.ShapeDtypeStruct((B, M, N), x.dtype),
        grid_spec=pltpu.PrefetchScalarGridSpec(
            num_scalar_prefetch=0,
            grid=grid,
            in_specs=[
                pl.BlockSpec((bb, M, N), lambda i: (i, 0, 0)),
                pl.BlockSpec((1, 1, N), lambda i: (0, 0, 0)),
                pl.BlockSpec((bb, 1, N), lambda i: (i, 0, 0)),
                pl.BlockSpec((bb, 1, N), lambda i: (i, 0, 0)),
            ],
            out_specs=pl.BlockSpec((bb, M, N), lambda i: (i, 0, 0)),
        ),
        compiler_params=pltpu.CompilerParams(
            dimension_semantics=("parallel",),
            vmem_limit_bytes=_vmem_limit_bytes(bb, M, N),
        ),
    )(x3, bias_l, scale_l, mean_l)

    return y3.reshape(B, L, C)


class RevIN:
    """JAX/Pallas port of the PyTorch RevIN module (forward only)."""

    def __init__(self, num_features: int, eps: float = 1e-5, affine: bool = True):
        self.num_features = num_features
        self.eps = float(eps)
        self.affine = affine
        # Matches nn.Parameter(torch.ones/zeros(num_features)); placeholders
        # (ignored by the kernels) when affine=False.
        self.affine_weight = jnp.ones((num_features,), jnp.float32)
        self.affine_bias = jnp.zeros((num_features,), jnp.float32)
        self.mean = None
        self.stdev = None

    def __call__(self, x, mode: str):
        if mode == "norm":
            y, self.mean, self.stdev = revin_norm(
                x, self.affine_weight, self.affine_bias,
                eps=self.eps, affine=self.affine)
            return y
        elif mode == "denorm":
            return revin_denorm(
                x, self.mean, self.stdev, self.affine_weight, self.affine_bias,
                eps=self.eps, affine=self.affine)
        else:
            raise NotImplementedError


# ---------------------------------------------------------------------------
# Pure-JAX reference + tests
# ---------------------------------------------------------------------------
def _ref_norm(x, w, b, eps, affine):
    mean = jnp.mean(x, axis=1, keepdims=True)
    std = jnp.sqrt(jnp.var(x, axis=1, keepdims=True) + eps)
    y = (x - mean) / std
    if affine:
        y = y * w + b
    return y, mean, std


def _ref_denorm(x, mean, std, w, b, eps, affine):
    if affine:
        x = (x - b) / (w + eps * eps)
    return x * std + mean


def _check(layer, x, atol=2e-5, rtol=2e-5):
    y = jax.block_until_ready(layer(x, "norm"))
    x_rec = jax.block_until_ready(layer(y, "denorm"))

    C = x.shape[-1]
    w = layer.affine_weight.reshape(1, 1, C)
    b = layer.affine_bias.reshape(1, 1, C)
    y_ref, m_ref, s_ref = _ref_norm(x, w, b, layer.eps, layer.affine)
    x_rec_ref = _ref_denorm(y_ref, m_ref, s_ref, w, b, layer.eps, layer.affine)

    assert jnp.allclose(y, y_ref, atol=atol, rtol=rtol)
    assert jnp.allclose(layer.mean, m_ref, atol=atol, rtol=rtol)
    assert jnp.allclose(layer.stdev, s_ref, atol=atol, rtol=rtol)
    assert jnp.allclose(x_rec, x_rec_ref, atol=atol, rtol=rtol)
    assert jnp.allclose(x_rec, x, atol=1e-4, rtol=1e-4)   # round trip


if __name__ == "__main__":
    key = jax.random.PRNGKey(0)
    k1, k2, k3 = jax.random.split(key, 3)

    # Test 1: typical RevIN shape (small C -> grouped lanes), affine=True.
    x1 = jax.random.normal(k1, (2, 128, 4), dtype=jnp.float32) * 3.0 + 1.5
    _check(RevIN(num_features=4, eps=1e-5, affine=True), x1)

    # Test 2: fused batch rows (bb > 1), affine=False.
    x2 = jax.random.normal(k2, (4, 96, 8), dtype=jnp.float32) * 0.7 - 2.0
    _check(RevIN(num_features=8, eps=1e-5, affine=False), x2)

    # Test 3: wide-channel case (C >= 128 -> no lane grouping / no rolls).
    x3 = jax.random.normal(k3, (2, 32, 256), dtype=jnp.float32) * 2.0 + 0.5
    _check(RevIN(num_features=256, eps=1e-5, affine=True), x3)

    print("KERNEL_OK")
</pallas_src>

<mosaic_0001>
module attributes {stable_mosaic.version = 11 : i64} {
  func.func @_revin_norm_kernel(%arg0: i32, %arg1: memref<1x4x128xf32, #tpu.memory_space<vmem>>, %arg2: memref<1x128xf32, #tpu.memory_space<vmem>>, %arg3: memref<1x128xf32, #tpu.memory_space<vmem>>, %arg4: memref<1x4x128xf32, #tpu.memory_space<vmem>>, %arg5: memref<1x1x4xf32, #tpu.memory_space<vmem>>, %arg6: memref<1x1x4xf32, #tpu.memory_space<vmem>>) attributes {dimension_semantics = [#tpu.dimension_semantics<parallel>], iteration_bounds = array<i64: 2>, scalar_prefetch = 0 : i64, scratch_operands = 0 : i64, tpu.core_type = #tpu.core_type<tc>, window_params = [{transform_indices = @transform_0, window_bounds = array<i64: 1, 4, 128>}, {pipeline_mode = #tpu.pipeline_mode<synchronous>, transform_indices = @transform_1, window_bounds = array<i64: 1, 128>}, {pipeline_mode = #tpu.pipeline_mode<synchronous>, transform_indices = @transform_2, window_bounds = array<i64: 1, 128>}, {transform_indices = @transform_3, window_bounds = array<i64: 1, 4, 128>}, {transform_indices = @transform_4, window_bounds = array<i64: 1, 1, 4>}, {transform_indices = @transform_5, window_bounds = array<i64: 1, 1, 4>}]} {
    %c0 = arith.constant 0 : index
    %c0_0 = arith.constant 0 : index
    %c0_1 = arith.constant 0 : index
    %0 = vector.load %arg1[%c0, %c0_0, %c0_1] : memref<1x4x128xf32, #tpu.memory_space<vmem>>, vector<1x4x128xf32>
    %cst = arith.constant dense<0.000000e+00> : vector<1x128xf32>
    %1 = vector.multi_reduction <add>, %0, %cst [1] : vector<1x4x128xf32> to vector<1x128xf32>
    %2 = arith.mulf %0, %0 : vector<1x4x128xf32>
    %cst_2 = arith.constant dense<0.000000e+00> : vector<1x128xf32>
    %3 = vector.multi_reduction <add>, %2, %cst_2 [1] : vector<1x4x128xf32> to vector<1x128xf32>
    %c4_i32 = arith.constant 4 : i32
    %4 = tpu.dynamic_rotate %1 by %c4_i32 dim 1 : vector<1x128xf32>, i32 -> vector<1x128xf32>
    %5 = arith.addf %1, %4 : vector<1x128xf32>
    %c8_i32 = arith.constant 8 : i32
    %6 = tpu.dynamic_rotate %5 by %c8_i32 dim 1 : vector<1x128xf32>, i32 -> vector<1x128xf32>
    %7 = arith.addf %5, %6 : vector<1x128xf32>
    %c16_i32 = arith.constant 16 : i32
    %8 = tpu.dynamic_rotate %7 by %c16_i32 dim 1 : vector<1x128xf32>, i32 -> vector<1x128xf32>
    %9 = arith.addf %7, %8 : vector<1x128xf32>
    %c32_i32 = arith.constant 32 : i32
    %10 = tpu.dynamic_rotate %9 by %c32_i32 dim 1 : vector<1x128xf32>, i32 -> vector<1x128xf32>
    %11 = arith.addf %9, %10 : vector<1x128xf32>
    %c64_i32 = arith.constant 64 : i32
    %12 = tpu.dynamic_rotate %11 by %c64_i32 dim 1 : vector<1x128xf32>, i32 -> vector<1x128xf32>
    %13 = arith.addf %11, %12 : vector<1x128xf32>
    %c4_i32_3 = arith.constant 4 : i32
    %14 = tpu.dynamic_rotate %3 by %c4_i32_3 dim 1 : vector<1x128xf32>, i32 -> vector<1x128xf32>
    %15 = arith.addf %3, %14 : vector<1x128xf32>
    %c8_i32_4 = arith.constant 8 : i32
    %16 = tpu.dynamic_rotate %15 by %c8_i32_4 dim 1 : vector<1x128xf32>, i32 -> vector<1x128xf32>
    %17 = arith.addf %15, %16 : vector<1x128xf32>
    %c16_i32_5 = arith.constant 16 : i32
    %18 = tpu.dynamic_rotate %17 by %c16_i32_5 dim 1 : vector<1x128xf32>, i32 -> vector<1x128xf32>
    %19 = arith.addf %17, %18 : vector<1x128xf32>
    %c32_i32_6 = arith.constant 32 : i32
    %20 = tpu.dynamic_rotate %19 by %c32_i32_6 dim 1 : vector<1x128xf32>, i32 -> vector<1x128xf32>
    %21 = arith.addf %19, %20 : vector<1x128xf32>
    %c64_i32_7 = arith.constant 64 : i32
    %22 = tpu.dynamic_rotate %21 by %c64_i32_7 dim 1 : vector<1x128xf32>, i32 -> vector<1x128xf32>
    %23 = arith.addf %21, %22 : vector<1x128xf32>
    %cst_8 = arith.constant 7.812500e-03 : f32
    %24 = vector.broadcast %cst_8 : f32 to vector<1x128xf32>
    %25 = arith.mulf %13, %24 : vector<1x128xf32>
    %cst_9 = arith.constant 7.812500e-03 : f32
    %26 = vector.broadcast %cst_9 : f32 to vector<1x128xf32>
    %27 = arith.mulf %23, %26 : vector<1x128xf32>
    %28 = arith.mulf %25, %25 : vector<1x128xf32>
    %29 = arith.subf %27, %28 : vector<1x128xf32>
    %cst_10 = arith.constant 0.000000e+00 : f32
    %30 = vector.broadcast %cst_10 : f32 to vector<1x128xf32>
    %31 = arith.maximumf %29, %30 : vector<1x128xf32>
    %cst_11 = arith.constant 9.99999974E-6 : f32
    %32 = vector.broadcast %cst_11 : f32 to vector<1x128xf32>
    %33 = arith.addf %31, %32 : vector<1x128xf32>
    %34 = math.sqrt %33 : vector<1x128xf32>
    %cst_12 = arith.constant 9.99999974E-6 : f32
    %35 = vector.broadcast %cst_12 : f32 to vector<1x128xf32>
    %36 = arith.addf %31, %35 : vector<1x128xf32>
    %37 = math.rsqrt %36 : vector<1x128xf32>
    %c0_13 = arith.constant 0 : index
    %c0_14 = arith.constant 0 : index
    %38 = vector.load %arg2[%c0_13, %c0_14] : memref<1x128xf32, #tpu.memory_space<vmem>>, vector<1x128xf32>
    %39 = arith.mulf %38, %37 : vector<1x128xf32>
    %40 = vector.shape_cast %25 : vector<1x128xf32> to vector<1x1x128xf32>
    %41 = vector.broadcast %40 : vector<1x1x128xf32> to vector<1x4x128xf32>
    %42 = arith.subf %0, %41 : vector<1x4x128xf32>
    %43 = vector.shape_cast %39 : vector<1x128xf32> to vector<1x1x128xf32>
    %44 = vector.broadcast %43 : vector<1x1x128xf32> to vector<1x4x128xf32>
    %45 = arith.mulf %42, %44 : vector<1x4x128xf32>
    %c0_15 = arith.constant 0 : index
    %c0_16 = arith.constant 0 : index
    %46 = vector.load %arg3[%c0_15, %c0_16] : memref<1x128xf32, #tpu.memory_space<vmem>>, vector<1x128xf32>
    %47 = vector.shape_cast %46 : vector<1x128xf32> to vector<1x1x128xf32>
    %48 = vector.broadcast %47 : vector<1x1x128xf32> to vector<1x4x128xf32>
    %49 = arith.addf %45, %48 : vector<1x4x128xf32>
    %c0_17 = arith.constant 0 : index
    %c0_18 = arith.constant 0 : index
    %c0_19 = arith.constant 0 : index
    %50 = vector.load %arg4[%c0_17, %c0_18, %c0_19] : memref<1x4x128xf32, #tpu.memory_space<vmem>>, vector<1x4x128xf32>
    tpu.vector_store %arg4[%c0_17, %c0_18, %c0_19], %49 {strides = array<i32>} : memref<1x4x128xf32, #tpu.memory_space<vmem>>, vector<1x4x128xf32>,
    %51 = vector.extract_strided_slice %25 {offsets = [0, 0], sizes = [1, 4], strides = [1, 1]} : vector<1x128xf32> to vector<1x4xf32>
    %52 = vector.shape_cast %51 : vector<1x4xf32> to vector<1x1x4xf32>
    %c0_20 = arith.constant 0 : index
    %c0_21 = arith.constant 0 : index
    %c0_22 = arith.constant 0 : index
    %53 = vector.load %arg5[%c0_20, %c0_21, %c0_22] : memref<1x1x4xf32, #tpu.memory_space<vmem>>, vector<1x1x4xf32>
    tpu.vector_store %arg5[%c0_20, %c0_21, %c0_22], %52 {strides = array<i32>} : memref<1x1x4xf32, #tpu.memory_space<vmem>>, vector<1x1x4xf32>,
    %54 = vector.extract_strided_slice %34 {offsets = [0, 0], sizes = [1, 4], strides = [1, 1]} : vector<1x128xf32> to vector<1x4xf32>
    %55 = vector.shape_cast %54 : vector<1x4xf32> to vector<1x1x4xf32>
    %c0_23 = arith.constant 0 : index
    %c0_24 = arith.constant 0 : index
    %c0_25 = arith.constant 0 : index
    %56 = vector.load %arg6[%c0_23, %c0_24, %c0_25] : memref<1x1x4xf32, #tpu.memory_space<vmem>>, vector<1x1x4xf32>
    tpu.vector_store %arg6[%c0_23, %c0_24, %c0_25], %55 {strides = array<i32>} : memref<1x1x4xf32, #tpu.memory_space<vmem>>, vector<1x1x4xf32>,
    return
  }
  func.func @transform_0(%arg0: i32) -> (i32, i32, i32) {
    %c0_i32 = arith.constant 0 : i32
    %c0_i32_0 = arith.constant 0 : i32
    %c0_i32_1 = arith.constant 0 : i32
    return %arg0, %c0_i32, %c0_i32_0 : i32, i32, i32
  }
  func.func @transform_1(%arg0: i32) -> (i32, i32) {
    %c0_i32 = arith.constant 0 : i32
    %c0_i32_0 = arith.constant 0 : i32
    %c0_i32_1 = arith.constant 0 : i32
    return %c0_i32, %c0_i32_0 : i32, i32
  }
  func.func @transform_2(%arg0: i32) -> (i32, i32) {
    %c0_i32 = arith.constant 0 : i32
    %c0_i32_0 = arith.constant 0 : i32
    %c0_i32_1 = arith.constant 0 : i32
    return %c0_i32, %c0_i32_0 : i32, i32
  }
  func.func @transform_3(%arg0: i32) -> (i32, i32, i32) {
    %c0_i32 = arith.constant 0 : i32
    %c0_i32_0 = arith.constant 0 : i32
    %c0_i32_1 = arith.constant 0 : i32
    return %arg0, %c0_i32, %c0_i32_0 : i32, i32, i32
  }
  func.func @transform_4(%arg0: i32) -> (i32, i32, i32) {
    %c0_i32 = arith.constant 0 : i32
    %c0_i32_0 = arith.constant 0 : i32
    %c0_i32_1 = arith.constant 0 : i32
    return %arg0, %c0_i32, %c0_i32_0 : i32, i32, i32
  }
  func.func @transform_5(%arg0: i32) -> (i32, i32, i32) {
    %c0_i32 = arith.constant 0 : i32
    %c0_i32_0 = arith.constant 0 : i32
    %c0_i32_1 = arith.constant 0 : i32
    return %arg0, %c0_i32, %c0_i32_0 : i32, i32, i32
  }
}

</mosaic_0001>

<llo_original>
// kernel: tpu_custom_call.1
$region0: #{tpu_custom_call.1}
  #allocation0 [shape = 'u32[]', space=smem, size = 0x4, offset = 0x4, fixed_abs, tag = 'smem constant byte address 0x4 - core index']
  #allocation1 [shape = 'u32[72,128]{1,0:T(1,128)}', space=vmem, size = 0x9000, scoped, tag = 'internal scratch']
  %s0 = inlined_call_operand.hbm [shape: f32[2,4,128], index: 0, kind: input, shape index: {}]
  %s1 = inlined_call_operand.hbm [shape: f32[1,128], index: 1, kind: input, shape index: {}]
  %s2 = inlined_call_operand.vmem [shape: f32[1,128], index: 2, kind: input, shape index: {}]
  %s3 = inlined_call_operand.hbm [shape: f32[2,4,128], index: 3, kind: output, shape index: {0}]
  %s4 = inlined_call_operand.hbm [shape: f32[2,1,4], index: 4, kind: output, shape index: {1}]
  %s5 = inlined_call_operand.hbm [shape: f32[2,1,4], index: 5, kind: output, shape index: {2}]
  %6 = xla_tuple %s3, %s4, %s5
  %s7 = sld [smem:[#allocation0]]
  $region69: #{tpu_custom_call.1} parent=0
    _
  %s9 = ssub.s32 1, %s7
  %s10 = scalar_select 0, %s9, %s7
  $region1: #{tpu_custom_call.1} parent=0
    #allocation2 [shape = 'u8[4096]{0}', space=vmem, size = 0x1000, scoped, tag = 'input window, operand 0']
    #allocation3 [shape = 's32[2]{0}', space=sflag, size = 0x8, scoped, tag = 'scoped memory for tpu_custom_call.1']
    #allocation4 [shape = 's32[2]{0}', space=sflag, size = 0x8, scoped, tag = 'scoped memory for tpu_custom_call.1']
    #allocation5 [shape = 'u8[512]{0}', space=vmem, size = 0x400, scoped, tag = 'input window, operand 1, single buffered']
    #allocation6 [shape = 's32[1]{0}', space=sflag, size = 0x4, scoped, tag = 'scoped memory for tpu_custom_call.1']
    #allocation7 [shape = 'u8[4096]{0}', space=vmem, size = 0x1000, scoped, tag = 'output window, operand 0']
    #allocation8 [shape = 'u8[1024]{0}', space=vmem, size = 0x400, scoped, tag = 'output window, operand 1']
    #allocation9 [shape = 's32[2]{0}', space=sflag, size = 0x8, scoped, tag = 'scoped memory for tpu_custom_call.1']
    #allocation10 [shape = 'u8[1024]{0}', space=vmem, size = 0x400, scoped, tag = 'output window, operand 2']
    %11 = vsyncpa [#allocation3], 0
    %s12 = scalar_lea.sflag [#allocation3], 1
    %13 = vsyncpa %s12, 0
    %14 = vsyncpa [#allocation6], 0
    %15 = vsyncpa [#allocation4], 0
    %s16 = scalar_lea.sflag [#allocation4], 1
    %17 = vsyncpa %s16, 0
    %18 = vsyncpa [#allocation9], 0
    %s19 = scalar_lea.sflag [#allocation9], 1
    %20 = vsyncpa %s19, 0
    loop: start=0, step=1, limit=4
    $region2: #{tpu_custom_call.1} parent=1 // loop_pre_header
      _
    $region3: #{tpu_custom_call.1} parent=1 // loop_header
      %s22 = sphi 0, %s26
      %p23 = scmp.ge.s32.totalorder %s22, 4
      %s32 = sphi 0, %s34
      %s35 = sphi 0, %s32
      %s36 = sphi 0, %s35
      %s52 = sphi 0, %s36
      %s56 = sphi 0, %s56
      %s58 = sphi 0, %s56
      %s59 = sphi 0, %s58
      %s73 = sphi 0, %s59
      %s77 = sphi 0, %s77
      %s79 = sphi 0, %s77
      %s80 = sphi 0, %s79
      %s94 = sphi 0, %s80
      %s100 = sphi 0, %s102
      %s103 = sphi 0, %s100
      %s104 = sphi 0, %s103
      %s120 = sphi 0, %s104
      %s126 = sphi 0, %s128
      %s129 = sphi 0, %s126
      %s130 = sphi 0, %s129
      %s146 = sphi 0, %s130
      %s152 = sphi 0, %s154
      %s155 = sphi 0, %s152
      %s156 = sphi 0, %s155
      %s172 = sphi 0, %s156
    $region4: #{tpu_custom_call.1} parent=1 // loop_header_branch
      %25 = sbr.rel (%p23) target = $region8
    $region5: #{tpu_custom_call.1} parent=1 // loop_body
      %s27 = ssub.s32 %s22, 1
      %s28 = ssub.s32 %s22, 2
      %s29 = sadd.s32 %s22, 1
      %s30 = ssub.s32 %s22, %s29
      %p31 = scmp.eq.s32.totalorder %s30, 0
      %s33 = sadd.s32 %s32, 1
      %s34 = scalar_select %p31, %s32, %s33
      %p37 = pneg %p31
      %p38 = scmp.eq.s32.totalorder %s22, 1
      %p39 = por %p37, %p38
      %p40 = scmp.ne.s32.totalorder %s32, %s35
      %p41 = scmp.eq.s32.totalorder %s22, 0
      %p42 = por %p40, %p41
      %p43 = scmp.ne.s32.totalorder %s32, %s35
      %p44 = scmp.eq.s32.totalorder %s27, 1
      %p45 = por %p43, %p44
      %p46 = scmp.ne.s32.totalorder %s35, %s36
      %p47 = scmp.eq.s32.totalorder %s27, 0
      %p48 = por %p46, %p47
      %p49 = scmp.ne.s32.totalorder %s35, %s36
      %p50 = scmp.eq.s32.totalorder %s28, 1
      %p51 = por %p49, %p50
      %p53 = scmp.ne.s32.totalorder %s36, %s52
      %p54 = scmp.eq.s32.totalorder %s28, 0
      %p55 = por %p53, %p54
      %s57 = sadd.s32 %s56, 1
      %p60 = scmp.eq.s32.totalorder %s22, 1
      %p61 = scmp.ne.s32.totalorder %s56, %s58
      %p62 = scmp.eq.s32.totalorder %s22, 0
      %p63 = por %p61, %p62
      %p64 = scmp.ne.s32.totalorder %s56, %s58
      %p65 = scmp.eq.s32.totalorder %s27, 1
      %p66 = por %p64, %p65
      %p67 = scmp.ne.s32.totalorder %s58, %s59
      %p68 = scmp.eq.s32.totalorder %s27, 0
      %p69 = por %p67, %p68
      %p70 = scmp.ne.s32.totalorder %s58, %s59
      %p71 = scmp.eq.s32.totalorder %s28, 1
      %p72 = por %p70, %p71
      %p74 = scmp.ne.s32.totalorder %s59, %s73
      %p75 = scmp.eq.s32.totalorder %s28, 0
      %p76 = por %p74, %p75
      %s78 = sadd.s32 %s77, 1
      %p81 = scmp.eq.s32.totalorder %s22, 1
      %p82 = scmp.ne.s32.totalorder %s77, %s79
      %p83 = scmp.eq.s32.totalorder %s22, 0
      %p84 = por %p82, %p83
      %p85 = scmp.ne.s32.totalorder %s77, %s79
      %p86 = scmp.eq.s32.totalorder %s27, 1
      %p87 = por %p85, %p86
      %p88 = scmp.ne.s32.totalorder %s79, %s80
      %p89 = scmp.eq.s32.totalorder %s27, 0
      %p90 = por %p88, %p89
      %p91 = scmp.ne.s32.totalorder %s79, %s80
      %p92 = scmp.eq.s32.totalorder %s28, 1
      %p93 = por %p91, %p92
      %p95 = scmp.ne.s32.totalorder %s80, %s94
      %p96 = scmp.eq.s32.totalorder %s28, 0
      %p97 = por %p95, %p96
      %s98 = ssub.s32 %s22, %s29
      %p99 = scmp.eq.s32.totalorder %s98, 0
      %s101 = sadd.s32 %s100, 1
      %s102 = scalar_select %p99, %s100, %s101
      %p105 = pneg %p99
      %p106 = scmp.eq.s32.totalorder %s22, 1
      %p107 = por %p105, %p106
      %p108 = scmp.ne.s32.totalorder %s100, %s103
      %p109 = scmp.eq.s32.totalorder %s22, 0
      %p110 = por %p108, %p109
      %p111 = scmp.ne.s32.totalorder %s100, %s103
      %p112 = scmp.eq.s32.totalorder %s27, 1
      %p113 = por %p111, %p112
      %p114 = scmp.ne.s32.totalorder %s103, %s104
      %p115 = scmp.eq.s32.totalorder %s27, 0
      %p116 = por %p114, %p115
      %p117 = scmp.ne.s32.totalorder %s103, %s104
      %p118 = scmp.eq.s32.totalorder %s28, 1
      %p119 = por %p117, %p118
      %p121 = scmp.ne.s32.totalorder %s104, %s120
      %p122 = scmp.eq.s32.totalorder %s28, 0
      %p123 = por %p121, %p122
      %s124 = ssub.s32 %s22, %s29
      %p125 = scmp.eq.s32.totalorder %s124, 0
      %s127 = sadd.s32 %s126, 1
      %s128 = scalar_select %p125, %s126, %s127
      %p131 = pneg %p125
      %p132 = scmp.eq.s32.totalorder %s22, 1
      %p133 = por %p131, %p132
      %p134 = scmp.ne.s32.totalorder %s126, %s129
      %p135 = scmp.eq.s32.totalorder %s22, 0
      %p136 = por %p134, %p135
      %p137 = scmp.ne.s32.totalorder %s126, %s129
      %p138 = scmp.eq.s32.totalorder %s27, 1
      %p139 = por %p137, %p138
      %p140 = scmp.ne.s32.totalorder %s129, %s130
      %p141 = scmp.eq.s32.totalorder %s27, 0
      %p142 = por %p140, %p141
      %p143 = scmp.ne.s32.totalorder %s129, %s130
      %p144 = scmp.eq.s32.totalorder %s28, 1
      %p145 = por %p143, %p144
      %p147 = scmp.ne.s32.totalorder %s130, %s146
      %p148 = scmp.eq.s32.totalorder %s28, 0
      %p149 = por %p147, %p148
      %s150 = ssub.s32 %s22, %s29
      %p151 = scmp.eq.s32.totalorder %s150, 0
      %s153 = sadd.s32 %s152, 1
      %s154 = scalar_select %p151, %s152, %s153
      %p157 = pneg %p151
      %p158 = scmp.eq.s32.totalorder %s22, 1
      %p159 = por %p157, %p158
      %p160 = scmp.ne.s32.totalorder %s152, %s155
      %p161 = scmp.eq.s32.totalorder %s22, 0
      %p162 = por %p160, %p161
      %p163 = scmp.ne.s32.totalorder %s152, %s155
      %p164 = scmp.eq.s32.totalorder %s27, 1
      %p165 = por %p163, %p164
      %p166 = scmp.ne.s32.totalorder %s155, %s156
      %p167 = scmp.eq.s32.totalorder %s27, 0
      %p168 = por %p166, %p167
      %p169 = scmp.ne.s32.totalorder %s155, %s156
      %p170 = scmp.eq.s32.totalorder %s28, 1
      %p171 = por %p169, %p170
      %p173 = scmp.ne.s32.totalorder %s156, %s172
      %p174 = scmp.eq.s32.totalorder %s28, 0
      %p175 = por %p173, %p174
      %p176 = scmp.le.s32.totalorder 1, %s22
      %p177 = scmp.lt.s32.totalorder %s22, 3
      %p178 = pnand %p176, %p177
      %p179 = pneg %p178
      // Predicated region
      $region9: #{tpu_custom_call.1} parent=5 // pred_check
        _
      $region10: #{tpu_custom_call.1} parent=5 // pred_check_branch
        %181 = sbr.rel (%p178) target = $region12
      $region11: #{tpu_custom_call.1} parent=5 // pred_region
        %s182 = ssub.s32 %s22, 1
        // Predicated region
        $region13: #{tpu_custom_call.1} parent=11 // pred_check
          %p183 = pneg %p69
        $region14: #{tpu_custom_call.1} parent=11 // pred_check_branch
          %185 = sbr.rel (%p183) target = $region16
        $region15: #{tpu_custom_call.1} parent=11 // pred_region
          %187 = vsyncadd [#allocation6], 0
          %s189 = sshll.u32 %s1, 4
          %s190 = int_to_ptr.hbm [resolvable:$true] %s189
          %s191 = sshll.u32 [#allocation5], 4
          %s192 = int_to_ptr.vmem [resolvable:$true] %s191
          %194 = dma.hbm_to_vmem [thread:$0]  %s190, 16, %s192, [#allocation6]
        $region16: #{tpu_custom_call.1} parent=11 // pred_fallthru
          _
        // Predicated region
        $region17: #{tpu_custom_call.1} parent=11 // pred_check
          %p195 = pneg %p90
        $region18: #{tpu_custom_call.1} parent=11 // pred_check_branch
          %197 = sbr.rel (%p195) target = $region20
        $region19: #{tpu_custom_call.1} parent=11 // pred_region
          _
        $region20: #{tpu_custom_call.1} parent=11 // pred_fallthru
          _
      $region12: #{tpu_custom_call.1} parent=5 // pred_fallthru
        _
      %p198 = scmp.lt.s32.totalorder %s22, 2
      // Predicated region
      $region21: #{tpu_custom_call.1} parent=5 // pred_check
        %p199 = pneg %p198
      $region22: #{tpu_custom_call.1} parent=5 // pred_check_branch
        %201 = sbr.rel (%p199) target = $region24
      $region23: #{tpu_custom_call.1} parent=5 // pred_region
        // Predicated region
        $region25: #{tpu_custom_call.1} parent=23 // pred_check
          %p202 = pneg %p42
        $region26: #{tpu_custom_call.1} parent=23 // pred_check_branch
          %204 = sbr.rel (%p202) target = $region28
        $region27: #{tpu_custom_call.1} parent=23 // pred_region
          %s205 = sand.u32 %s32, 1
          %s206 = scalar_lea.sflag [#allocation3], %s205
          %s207 = sand.u32 %s32, 1
          %s208 = smul.addr %s207, 4
          %s209 = scalar_lea.vmem [#allocation2], %s208
          %211 = vsyncadd %s206, 0
          %s212 = smul.addr %s22, 4
          %s213 = scalar_lea.hbm %s0, %s212
          %s215 = sshll.u32 %s213, 4
          %s216 = int_to_ptr.hbm [resolvable:$true] %s215
          %s217 = sshll.u32 %s209, 4
          %s218 = int_to_ptr.vmem [resolvable:$true] %s217
          %220 = dma.hbm_to_vmem [thread:$0]  %s216, 64, %s218, %s206
        $region28: #{tpu_custom_call.1} parent=23 // pred_fallthru
          _
      $region24: #{tpu_custom_call.1} parent=5 // pred_fallthru
        _
      %p221 = scmp.le.s32.totalorder 1, %s22
      %p222 = scmp.lt.s32.totalorder %s22, 3
      %p223 = pnand %p221, %p222
      %p224 = pneg %p223
      // Predicated region
      $region29: #{tpu_custom_call.1} parent=5 // pred_check
        _
      $region30: #{tpu_custom_call.1} parent=5 // pred_check_branch
        %226 = sbr.rel (%p223) target = $region32
      $region31: #{tpu_custom_call.1} parent=5 // pred_region
        %s227 = ssub.s32 %s22, 1
        %s228 = sand.u32 %s35, 1
        %s229 = scalar_lea.sflag [#allocation3], %s228
        %s230 = sand.u32 %s35, 1
        %s231 = smul.addr %s230, 4
        %s232 = scalar_lea.vmem [#allocation2], %s231
        // Predicated region
        $region33: #{tpu_custom_call.1} parent=31 // pred_check
          %p233 = pneg %p48
        $region34: #{tpu_custom_call.1} parent=31 // pred_check_branch
          %235 = sbr.rel (%p233) target = $region36
        $region35: #{tpu_custom_call.1} parent=31 // pred_region
          %237 = dma.done %s229, 64
        $region36: #{tpu_custom_call.1} parent=31 // pred_fallthru
          _
        // Predicated region
        $region37: #{tpu_custom_call.1} parent=31 // pred_check
          %p238 = pneg %p69
        $region38: #{tpu_custom_call.1} parent=31 // pred_check_branch
          %240 = sbr.rel (%p238) target = $region40
        $region39: #{tpu_custom_call.1} parent=31 // pred_region
          %242 = dma.done [#allocation6], 16
        $region40: #{tpu_custom_call.1} parent=31 // pred_fallthru
          _
        %s243 = sand.u32 %s35, 1
        %s244 = scalar_lea.sflag [#allocation3], %s243
        %s245 = sand.u32 %s35, 1
        %s246 = smul.addr %s245, 4
        %s247 = scalar_lea.vmem [#allocation2], %s246
        %p248 = pneg %p48
        %p249 = pneg %p45
        %p250 = pneg %p69
        %p251 = pneg %p66
        %p252 = pneg %p90
        %p253 = pneg %p87
        %p254 = pneg %p116
        %p255 = pneg %p113
        %s256 = sand.u32 %s103, 1
        %s257 = scalar_lea.sflag [#allocation4], %s256
        %s258 = sand.u32 %s103, 1
        %s259 = smul.addr %s258, 4
        %s260 = scalar_lea.vmem [#allocation7], %s259
        %p261 = pneg %p142
        %p262 = pneg %p139
        %s263 = sand.u32 %s27, 1
        %s264 = scalar_lea.sflag [#allocation9], %s263
        %s265 = sand.u32 %s129, 1
        %s266 = scalar_lea.vmem [#allocation8], %s265
        %p267 = pneg %p168
        %p268 = pneg %p165
        %s269 = sand.u32 %s27, 1
        %s270 = scalar_lea.sflag [#allocation9], %s269
        %s271 = sand.u32 %s155, 1
        %s272 = scalar_lea.vmem [#allocation10], %s271
        %v273 = vld [vmem:[%s232] sm:$0xf]
        %vm274 = vcmask 1043456
        %v275 = vsel %vm274, %v273, 0.0
        %v276 = vrot.slane %v275, 4
        %v277 = vadd.f32 %v275, %v276
        %v278 = vrot.slane %v277, 2
        %v279 = vadd.f32 %v277, %v278
        %v280 = vrot.slane %v279, 1
        %v281 = vadd.f32 %v279, %v280
        %v282 = vmul.f32 %v273, %v273
        %v283 = vsel %vm274, %v282, 0.0
        %v284 = vrot.slane %v283, 4
        %v285 = vadd.f32 %v283, %v284
        %v286 = vrot.slane %v285, 2
        %v287 = vadd.f32 %v285, %v286
        %v288 = vrot.slane %v287, 1
        %v289 = vadd.f32 %v287, %v288
        %290 = vrot.lane.b32.xlu0 %v281, 4
        %v291 = vpop.permute.xlu0 %290
        %v292 = vadd.f32 %v281, %v291
        %293 = vrot.lane.b32.xlu0 %v292, 8
        %v294 = vpop.permute.xlu0 %293
        %v295 = vadd.f32 %v292, %v294
        %296 = vrot.lane.b32.xlu0 %v295, 16
        %v297 = vpop.permute.xlu0 %296
        %v298 = vadd.f32 %v295, %v297
        %299 = vrot.lane.b32.xlu0 %v298, 32
        %v300 = vpop.permute.xlu0 %299
        %v301 = vadd.f32 %v298, %v300
        %302 = vrot.lane.b32.xlu0 %v301, 64
        %v303 = vpop.permute.xlu0 %302
        %v304 = vadd.f32 %v301, %v303
        %305 = vrot.lane.b32.xlu0 %v289, 4
        %v306 = vpop.permute.xlu0 %305
        %v307 = vadd.f32 %v289, %v306
        %308 = vrot.lane.b32.xlu0 %v307, 8
        %v309 = vpop.permute.xlu0 %308
        %v310 = vadd.f32 %v307, %v309
        %311 = vrot.lane.b32.xlu0 %v310, 16
        %v312 = vpop.permute.xlu0 %311
        %v313 = vadd.f32 %v310, %v312
        %314 = vrot.lane.b32.xlu0 %v313, 32
        %v315 = vpop.permute.xlu0 %314
        %v316 = vadd.f32 %v313, %v315
        %317 = vrot.lane.b32.xlu0 %v316, 64
        %v318 = vpop.permute.xlu0 %317
        %v319 = vadd.f32 %v316, %v318
        %v320 = vmul.f32 %v304, 0.0078125
        %v321 = vmul.f32 %v319, 0.0078125
        %v322 = vmul.f32 %v320, %v320
        %v323 = vsub.f32 %v321, %v322
        %v324 = vmax.f32 %v323, 0.0
        %v325 = vadd.f32 %v324, 1e-05
        %v326 = vrsqrt.pop %v325
        %v327 = vmul.f32 %v326, %v325
        %v328 = vmul.f32 %v327, %v326
        %v329 = vmul.f32 0.5, %v328
        %v330 = vsub.f32 1.5, %v329
        %v331 = vmul.f32 %v326, %v330
        %v332 = vmul.f32 %v325, %v331
        %vm333 = vcmp.eq.f32.partialorder %v325, inf
        %v334 = vsel %vm333, %v325, %v332
        %vm335 = vcmp.eq.f32.partialorder %v325, 0.0
        %v336 = vand.u32 %v325, 2147483648
        %v337 = vsel %vm335, %v336, %v334
        %v338 = vrsqrt.pop %v325
        %v339 = vmul.f32 %v338, %v325
        %v340 = vmul.f32 %v339, %v338
        %v341 = vmul.f32 0.5, %v340
        %v342 = vsub.f32 1.5, %v341
        %v343 = vmul.f32 %v338, %v342
        %vm344 = vweird.f32 %v325
        %vm345 = vweird.f32 %v338
        %vm346 = vmor %vm344, %vm345
        %v347 = vsel %vm346, %v338, %v343
        %v348 = vld [vmem:[#allocation5] sm:$0x1]
        %v349 = vmul.f32 %v348, %v347
        %v350 = vperm.slane %v320, 0
        %v351 = vsub.f32 %v273, %v350
        %v353 = vperm.slane %v349, 0
        %v355 = vmul.f32 %v351, %v353
        %v356 = vld [vmem:[%s2] sm:$0x1]
        %v358 = vperm.slane %v356, 0
        %v360 = vadd.f32 %v355, %v358
        %361 = vst [vmem:[%s260] sm:$0xf] %v360
        %vm362 = vcmask 24576
        %363 = vst.msk [vmem:[%s266] sm:$0x1] %vm362, %v320
        %364 = vst.msk [vmem:[%s272] sm:$0x1] %vm362, %v337
        %s365 = sand.u32 %s103, 1
        %s366 = scalar_lea.sflag [#allocation4], %s365
        %s367 = sand.u32 %s103, 1
        %s368 = smul.addr %s367, 4
        %s369 = scalar_lea.vmem [#allocation7], %s368
        %s370 = sand.u32 %s27, 1
        %s371 = scalar_lea.sflag [#allocation9], %s370
        %s372 = sand.u32 %s129, 1
        %s373 = scalar_lea.vmem [#allocation8], %s372
        %s374 = sand.u32 %s27, 1
        %s375 = scalar_lea.sflag [#allocation9], %s374
        %s376 = sand.u32 %s155, 1
        %s377 = scalar_lea.vmem [#allocation10], %s376
        // Predicated region
        $region41: #{tpu_custom_call.1} parent=31 // pred_check
          %p378 = pneg %p113
        $region42: #{tpu_custom_call.1} parent=31 // pred_check_branch
          %380 = sbr.rel (%p378) target = $region44
        $region43: #{tpu_custom_call.1} parent=31 // pred_region
          %382 = vsyncadd %s366, 0
          %s383 = smul.addr %s27, 4
          %s384 = scalar_lea.hbm %s3, %s383
          %s386 = sshll.u32 %s369, 4
          %s387 = int_to_ptr.vmem [resolvable:$true] %s386
          %s388 = sshll.u32 %s384, 4
          %s389 = int_to_ptr.hbm [resolvable:$true] %s388
          %391 = dma.vmem_to_hbm [thread:$0]  %s387, 64, %s389, %s366
        $region44: #{tpu_custom_call.1} parent=31 // pred_fallthru
          _
        // Predicated region
        $region45: #{tpu_custom_call.1} parent=31 // pred_check
          %p392 = pneg %p139
        $region46: #{tpu_custom_call.1} parent=31 // pred_check_branch
          %394 = sbr.rel (%p392) target = $region48
        $region47: #{tpu_custom_call.1} parent=31 // pred_region
          %396 = vsyncadd %s371, 0
          %s397 = scalar_lea.hbm %s4, %s27
          %s399 = sshll.u32 %s373, 4
          %s400 = int_to_ptr.vmem [resolvable:$true] %s399
          %s401 = sshll.u32 %s397, 4
          %s402 = int_to_ptr.hbm [resolvable:$true] %s401
          %404 = dma.vmem_to_hbm [thread:$0]  %s400, 16, %s402, %s371
        $region48: #{tpu_custom_call.1} parent=31 // pred_fallthru
          _
        // Predicated region
        $region49: #{tpu_custom_call.1} parent=31 // pred_check
          %p405 = pneg %p165
        $region50: #{tpu_custom_call.1} parent=31 // pred_check_branch
          %407 = sbr.rel (%p405) target = $region52
        $region51: #{tpu_custom_call.1} parent=31 // pred_region
          %409 = vsyncadd %s375, 0
          %s410 = scalar_lea.hbm %s5, %s27
          %s412 = sshll.u32 %s377, 4
          %s413 = int_to_ptr.vmem [resolvable:$true] %s412
          %s414 = sshll.u32 %s410, 4
          %s415 = int_to_ptr.hbm [resolvable:$true] %s414
          %417 = dma.vmem_to_hbm [thread:$0]  %s413, 16, %s415, %s375
        $region52: #{tpu_custom_call.1} parent=31 // pred_fallthru
          _
      $region32: #{tpu_custom_call.1} parent=5 // pred_fallthru
        _
      %p418 = scmp.le.s32.totalorder 2, %s22
      // Predicated region
      $region53: #{tpu_custom_call.1} parent=5 // pred_check
        %p419 = pneg %p418
      $region54: #{tpu_custom_call.1} parent=5 // pred_check_branch
        %421 = sbr.rel (%p419) target = $region56
      $region55: #{tpu_custom_call.1} parent=5 // pred_region
        %s422 = ssub.s32 %s22, 2
        // Predicated region
        $region57: #{tpu_custom_call.1} parent=55 // pred_check
          %p423 = pneg %p119
        $region58: #{tpu_custom_call.1} parent=55 // pred_check_branch
          %425 = sbr.rel (%p423) target = $region60
        $region59: #{tpu_custom_call.1} parent=55 // pred_region
          %s426 = sand.u32 %s104, 1
          %s427 = scalar_lea.sflag [#allocation4], %s426
          %s428 = sand.u32 %s104, 1
          %s429 = smul.addr %s428, 4
          %s430 = scalar_lea.vmem [#allocation7], %s429
          %432 = dma.done %s427, 64
        $region60: #{tpu_custom_call.1} parent=55 // pred_fallthru
          _
        // Predicated region
        $region61: #{tpu_custom_call.1} parent=55 // pred_check
          %p433 = pneg %p145
        $region62: #{tpu_custom_call.1} parent=55 // pred_check_branch
          %435 = sbr.rel (%p433) target = $region64
        $region63: #{tpu_custom_call.1} parent=55 // pred_region
          %s436 = sand.u32 %s28, 1
          %s437 = scalar_lea.sflag [#allocation9], %s436
          %s438 = sand.u32 %s130, 1
          %s439 = scalar_lea.vmem [#allocation8], %s438
          %441 = dma.done %s437, 16
        $region64: #{tpu_custom_call.1} parent=55 // pred_fallthru
          _
        // Predicated region
        $region65: #{tpu_custom_call.1} parent=55 // pred_check
          %p442 = pneg %p171
        $region66: #{tpu_custom_call.1} parent=55 // pred_check_branch
          %444 = sbr.rel (%p442) target = $region68
        $region67: #{tpu_custom_call.1} parent=55 // pred_region
          %s445 = sand.u32 %s28, 1
          %s446 = scalar_lea.sflag [#allocation9], %s445
          %s447 = sand.u32 %s156, 1
          %s448 = scalar_lea.vmem [#allocation10], %s447
          %450 = dma.done %s446, 16
        $region68: #{tpu_custom_call.1} parent=55 // pred_fallthru
          _
      $region56: #{tpu_custom_call.1} parent=5 // pred_fallthru
        _
    $region6: #{tpu_custom_call.1} parent=1 // loop_footer
      %s26 = sadd.s32 1, %s22
    $region7: #{tpu_custom_call.1} parent=1 // loop_footer_branch
      %21 = sbr.rel target = $region3
    $region8: #{tpu_custom_call.1} parent=1 // loop_exit
      _
    %451 = vsyncpa [#allocation3], 1
    %s452 = scalar_lea.sflag [#allocation3], 1
    %453 = vsyncpa %s452, 1
    %454 = vsyncpa [#allocation6], 1
    %455 = vsyncpa [#allocation4], 1
    %s456 = scalar_lea.sflag [#allocation4], 1
    %457 = vsyncpa %s456, 1
    %458 = vsyncpa [#allocation9], 1
    %s459 = scalar_lea.sflag [#allocation9], 1
    %460 = vsyncpa %s459, 1

</llo_original>
